<compile_context>
chip_gen: v5e
topology: v5e:2x2
jax: 0.10.0
libtpu: 0.0.40
codegen_flags: <defaults>
</compile_context>

<pallas_src>
import functools

import numpy as np
import jax
import jax.numpy as jnp
from jax.experimental import pallas as pl
from jax.experimental.pallas import tpu as pltpu


# ----------------------------------------------------------------------------
# Pallas kernel: one grid step == TB batch elements.  Emits a lane-dense
# (TB, 1, 128) block: lanes [0..3] = [bce_sum, bce_cnt, mse_b, cont_b].
# ----------------------------------------------------------------------------
def _ktloss_kernel(pr_ref, need_ref, ht_ref, httr_ref, yt_ref, exam_ref,
                   out_ref):
    eps = 1e-8
    e_diag = float(np.exp(1.0))          # exp(cos_ii) for unit vectors

    # ------------------------- BCE over next-step answers --------------------
    pr = pr_ref[...].astype(jnp.float32)                        # [TB, 2, S-1]
    pred = pr[:, 0:1, :]                                        # [TB, 1, S-1]
    real = pr[:, 1:2, :]                                        # [TB, 1, S-1]
    amask = ((real != -1.0) & (real != 2.0)).astype(jnp.float32)
    # nn.BCELoss clamps log at -100; masked/degenerate entries stay finite
    logp = jnp.maximum(jnp.log(jnp.maximum(pred, 1e-38)), -100.0)
    log1mp = jnp.maximum(jnp.log(jnp.maximum(1.0 - pred, 1e-38)), -100.0)
    bce_elem = -(real * logp + (1.0 - real) * log1mp)
    bce_sum = jnp.sum(bce_elem * amask, axis=2, keepdims=True)  # [TB, 1, 1]
    bce_cnt = jnp.sum(amask, axis=2, keepdims=True)             # [TB, 1, 1]

    # -------------------- judge_score: masked MSE (per batch) ----------------
    yt = yt_ref[...].astype(jnp.float32)                        # [TB, S, C]
    exam = exam_ref[...].astype(jnp.float32)                    # [TB, S, C]
    emask = (exam != -1.0).astype(jnp.float32)
    d = (yt - exam) * emask
    num = jnp.sum(jnp.sum(d * d, axis=2, keepdims=True), axis=1, keepdims=True)
    den = jnp.sum(jnp.sum(emask, axis=2, keepdims=True), axis=1, keepdims=True)
    mse_b = num / jnp.maximum(den, 1.0)                         # [TB, 1, 1]

    # ----------------------- ContrastiveLoss (per batch) ---------------------
    ht = ht_ref[...].astype(jnp.float32)                        # [TB, S, H]
    tr = httr_ref[...].astype(jnp.float32)                      # [TB, S, H]
    sel = (need_ref[...] == 1).astype(jnp.float32)              # [TB, S, 1]
    nsel = jnp.sum(sel, axis=1, keepdims=True)                  # [TB, 1, 1]
    s_total = float(ht_ref.shape[1])

    # Fold the norms into the vectors: the matmul then yields cosine directly.
    inv_hn = jax.lax.rsqrt(
        jnp.maximum(jnp.sum(ht * ht, axis=2, keepdims=True), eps * eps))
    inv_tn = jax.lax.rsqrt(
        jnp.maximum(jnp.sum(tr * tr, axis=2, keepdims=True), eps * eps))
    htn = ht * inv_hn * sel      # unselected rows zeroed -> dot with them = 0
    trn = tr * inv_tn

    # bf16 operands -> full-rate MXU; f32 accumulation.
    htn_bf = htn.astype(jnp.bfloat16)
    cos = jnp.einsum('bsh,bth->bst', htn_bf, htn_bf,
                     preferred_element_type=jnp.float32)        # [TB, S, S]
    row_sum = jnp.sum(jnp.exp(cos), axis=2, keepdims=True)      # [TB, S, 1]
    # Each zeroed (unselected) column contributed exp(0)=1; the diagonal of a
    # selected row contributed exp(1)=e (unit vectors).  Subtract analytically.
    neg = row_sum - (s_total - nsel) - e_diag                   # [TB, S, 1]
    pos = jnp.exp(jnp.sum(htn * trn, axis=2, keepdims=True))    # [TB, S, 1]
    denom = jnp.maximum(jnp.where(sel > 0.0, pos + neg, 1.0), 1e-30)
    frac = sel * pos * pl.reciprocal(denom, approx=True)
    contrib = jnp.sum(frac, axis=1, keepdims=True)              # [TB, 1, 1]
    # A batch with zero selected rows contributes 0 here (the PyTorch reference
    # would produce -inf); documented deviation.
    cont_b = jnp.where(nsel > 0.0,
                       -jnp.log(jnp.maximum(contrib, 1e-38)),
                       jnp.zeros_like(contrib))

    # ------------- pack the per-batch scalars into one lane-dense row --------
    col = jax.lax.broadcasted_iota(jnp.int32, out_ref.shape, 2)  # [TB, 1, 128]
    row = jnp.zeros(out_ref.shape, jnp.float32)
    row = jnp.where(col == 0, bce_sum, row)
    row = jnp.where(col == 1, bce_cnt, row)
    row = jnp.where(col == 2, mse_b, row)
    row = jnp.where(col == 3, cont_b, row)
    out_ref[...] = row


def _pick_tb(B, S, H, C):
    """Batches per grid step: amortize per-step overhead, keep grid >= 2
    (both v7x TensorCores busy), and stay inside a conservative VMEM budget
    (the [S,S] cos + exp intermediates dominate for large S)."""
    per_b = (2 * S * S * 4                        # cos + exp(cos) f32
             + 2 * 2 * (2 * S * H + 2 * S * C)    # double-buffered bf16 inputs
             + 4 * S * 4)                         # small [S,1] temporaries
    budget = 12 * 1024 * 1024
    cap = max(1, budget // max(per_b, 1))
    for cand in (16, 8, 4, 2):
        if cand <= cap and B % cand == 0 and B // cand >= 2:
            return cand
    return 1 if B >= 2 else B


@functools.lru_cache(maxsize=None)
def _make_ktloss_call(B, S, H, C):
    TB = _pick_tb(B, S, H, C)
    sm1 = S - 1

    def bspec(shape):
        return pl.BlockSpec(shape, lambda b: (b, 0, 0))

    return pl.pallas_call(
        _ktloss_kernel,
        grid=(B // TB,),
        in_specs=[
            bspec((TB, 2, sm1)),    # pred (row 0) + shifted real (row 1)
            bspec((TB, S, 1)),      # need_score (int32)
            bspec((TB, S, H)),      # ht          (bf16)
            bspec((TB, S, H)),      # ht_trans    (bf16)
            bspec((TB, S, C)),      # yt          (bf16)
            bspec((TB, S, C)),      # exam (densified, -1 padded, bf16)
        ],
        out_specs=bspec((TB, 1, 128)),
        out_shape=jax.ShapeDtypeStruct((B, 1, 128), jnp.float32),
        compiler_params=pltpu.CompilerParams(
            dimension_semantics=("parallel",)),   # v7x: shard steps across TCs
    )


# ----------------------------------------------------------------------------
# Host-side glue (dict lookup / densify, metrics) + wrapper class.
# ----------------------------------------------------------------------------
def _auc_pairwise(y_true, y_score):
    # Mann-Whitney rank statistic with ties at 0.5 == sklearn roc_auc_score.
    pos = y_score[y_true == 1.0]
    neg = y_score[y_true == 0.0]
    if pos.size == 0 or neg.size == 0:
        return -1.0
    cmp = (pos[:, None] > neg[None, :]).astype(np.float64) \
        + 0.5 * (pos[:, None] == neg[None, :])
    return float(cmp.mean())


class KTLossPallas:
    def __init__(self, exam_dic, k1=0.0, k2=0.0):
        self.exam_dic = exam_dic
        self.k1 = float(k1)
        self.k2 = float(k2)

    def __call__(self, students, pred_answers, real_answers, ht, ht_trans,
                 yt, need_score):
        real_np = np.asarray(real_answers, dtype=np.float32)
        pred_np = np.asarray(pred_answers, dtype=np.float32)
        need_np = np.asarray(need_score)
        stud_np = np.asarray(students)
        B, S = real_np.shape
        H = np.asarray(ht).shape[2]
        C = np.asarray(yt).shape[2]

        real_shift = real_np[:, 1:]
        amask_np = (real_shift != -1.0) & (real_shift != 2.0)

        # fuse pred + shifted real answers into one packed input stream
        pr_packed = np.stack([pred_np, real_shift], axis=1)      # [B, 2, S-1]

        # densify exam_dic -> [B, S, C]; rows that are not "needed" stay at -1
        # TODO(synk): cache this densification + device transfer across calls.
        exam_full = np.full((B, S, C), -1.0, dtype=np.float32)
        for b in range(B):
            sid = int(stud_np[b, 0])
            rows = np.where(need_np[b] == 1)[0]
            er = np.asarray(self.exam_dic[sid], dtype=np.float32)
            assert er.shape[0] == rows.shape[0]
            exam_full[b, rows, :] = er

        call = _make_ktloss_call(B, S, H, C)
        res = call(
            jnp.asarray(pr_packed, dtype=jnp.float32),
            jnp.asarray(need_np, dtype=jnp.int32).reshape(B, S, 1),
            jnp.asarray(ht, dtype=jnp.bfloat16),
            jnp.asarray(ht_trans, dtype=jnp.bfloat16),
            jnp.asarray(yt, dtype=jnp.bfloat16),
            jnp.asarray(exam_full, dtype=jnp.bfloat16),
        )                                                   # [B, 1, 128]
        res2 = res[:, 0, :]                                 # [B, 128]
        bce_sum = jnp.sum(res2[:, 0])
        bce_cnt = jnp.sum(res2[:, 1])
        mse_sum = jnp.sum(res2[:, 2])
        cont_sum = jnp.sum(res2[:, 3])
        # bce_cnt == 0 would give NaN in the reference; guarded here.
        loss = (bce_sum / jnp.maximum(bce_cnt, 1.0)
                + self.k1 / B * mse_sum
                + self.k2 / B * cont_sum)

        # ---- host-side metrics (non-differentiable; original used sklearn) --
        y_true = real_shift[amask_np]
        y_pred = pred_np[amask_np]
        auc = _auc_pairwise(y_true, y_pred)
        if auc == -1.0:
            acc = -1.0
        else:
            acc = float(np.mean(((y_pred > 0.5).astype(np.float32) == y_true)))
        return loss, auc, acc


# ----------------------------------------------------------------------------
# Pure-numpy reference (mirrors the PyTorch forward) for validation.
# ----------------------------------------------------------------------------
def reference_loss(pred, real, ht, ht_trans, yt, need, students, exam_dic, k1, k2):
    real_s = real[:, 1:]
    amask = (real_s != -1.0) & (real_s != 2.0)
    p = pred[amask]
    r = real_s[amask]
    loss = float(np.mean(-(r * np.log(p) + (1.0 - r) * np.log(1.0 - p))))
    B = real.shape[0]
    for b in range(B):
        sid = int(students[b, 0])
        sel = need[b] == 1
        y = yt[b][sel]
        er = np.asarray(exam_dic[sid], dtype=np.float32)
        m = er != -1.0
        mse = float(np.mean((y[m] - er[m]) ** 2))
        o = ht[b][sel]
        t = ht_trans[b][sel]
        on = np.linalg.norm(o, axis=1)
        tn = np.linalg.norm(t, axis=1)
        n = o.shape[0]
        cos_nn = (o @ o.T) / np.maximum(on[:, None] * on[None, :], 1e-8)
        cos_pt = np.sum(o * t, axis=1) / np.maximum(on * tn, 1e-8)
        eye = np.eye(n, dtype=np.float32)
        neg = np.sum(np.exp(cos_nn) * (1.0 - eye), axis=1)
        pos = np.exp(cos_pt)
        cl = float(-np.log(np.sum(pos / (pos + neg))))
        loss += mse * k1 / B + cl * k2 / B
    return loss


if __name__ == "__main__":
    B, S, H, C = 2, 8, 32, 16
    k1, k2 = 0.5, 0.25

    key = jax.random.PRNGKey(0)
    k_pred, k_real, k_ht, k_httr, k_yt, k_e0, k_e1 = jax.random.split(key, 7)

    def bf16_round(x):
        # writable numpy copy, rounded to bf16 (the kernel's storage dtype)
        return np.array(jnp.asarray(x, jnp.bfloat16).astype(jnp.float32))

    pred_answers = np.array(
        jax.nn.sigmoid(jax.random.normal(k_pred, (B, S - 1))), dtype=np.float32)
    real_answers = np.array(
        jax.random.bernoulli(k_real, 0.5, (B, S))).astype(np.float32)
    real_answers[0, 1] = 1.0          # make sure both classes present
    real_answers[0, 2] = 0.0
    real_answers[0, 3] = -1.0         # masked-out positions
    real_answers[1, 5] = 2.0

    ht = bf16_round(jax.random.normal(k_ht, (B, S, H), dtype=jnp.float32))
    ht_trans = bf16_round(
        ht + 0.1 * np.array(jax.random.normal(k_httr, (B, S, H),
                                              dtype=jnp.float32)))
    yt = bf16_round(jax.nn.sigmoid(jax.random.normal(k_yt, (B, S, C))))

    need_score = np.zeros((B, S), dtype=np.int32)
    need_score[0, [1, 3, 5]] = 1
    need_score[0, 6] = -1
    need_score[1, [0, 2]] = 1
    need_score[1, 4] = 2

    students = np.stack([np.full((S,), 10, np.int32),
                         np.full((S,), 20, np.int32)])

    exam0 = bf16_round(jax.random.uniform(k_e0, (3, C)))
    exam0[0, 2] = -1.0
    exam0[2, 5] = -1.0
    exam1 = bf16_round(jax.random.uniform(k_e1, (2, C)))
    exam1[1, 0] = -1.0
    exam_dic = {10: exam0, 20: exam1}

    kt_loss = KTLossPallas(exam_dic, k1=k1, k2=k2)
    loss, auc, acc = kt_loss(students, pred_answers, real_answers,
                             ht, ht_trans, yt, need_score)
    loss = jax.block_until_ready(loss)

    ref = reference_loss(pred_answers, real_answers, ht, ht_trans, yt,
                         need_score, students, exam_dic, k1, k2)
    np.testing.assert_allclose(float(loss), ref, rtol=5e-3, atol=5e-3)

    print("KERNEL_OK")
</pallas_src>

<mosaic_0001>
module attributes {stable_mosaic.version = 11 : i64} {
  func.func @_ktloss_kernel(%arg0: i32, %arg1: memref<1x2x7xf32, #tpu.memory_space<vmem>>, %arg2: memref<1x8x1xi32, #tpu.memory_space<vmem>>, %arg3: memref<1x8x32xbf16, #tpu.memory_space<vmem>>, %arg4: memref<1x8x32xbf16, #tpu.memory_space<vmem>>, %arg5: memref<1x8x16xbf16, #tpu.memory_space<vmem>>, %arg6: memref<1x8x16xbf16, #tpu.memory_space<vmem>>, %arg7: memref<1x1x128xf32, #tpu.memory_space<vmem>>) attributes {dimension_semantics = [#tpu.dimension_semantics<parallel>], iteration_bounds = array<i64: 2>, scalar_prefetch = 0 : i64, scratch_operands = 0 : i64, tpu.core_type = #tpu.core_type<tc>, window_params = [{transform_indices = @transform_0, window_bounds = array<i64: 1, 2, 7>}, {transform_indices = @transform_1, window_bounds = array<i64: 1, 8, 1>}, {transform_indices = @transform_2, window_bounds = array<i64: 1, 8, 32>}, {transform_indices = @transform_3, window_bounds = array<i64: 1, 8, 32>}, {transform_indices = @transform_4, window_bounds = array<i64: 1, 8, 16>}, {transform_indices = @transform_5, window_bounds = array<i64: 1, 8, 16>}, {transform_indices = @transform_6, window_bounds = array<i64: 1, 1, 128>}]} {
    %c0 = arith.constant 0 : index
    %c0_0 = arith.constant 0 : index
    %c0_1 = arith.constant 0 : index
    %0 = vector.load %arg1[%c0, %c0_0, %c0_1] : memref<1x2x7xf32, #tpu.memory_space<vmem>>, vector<1x2x7xf32>
    %1 = vector.extract_strided_slice %0 {offsets = [0, 0, 0], sizes = [1, 1, 7], strides = [1, 1, 1]} : vector<1x2x7xf32> to vector<1x1x7xf32>
    %2 = vector.extract_strided_slice %0 {offsets = [0, 1, 0], sizes = [1, 1, 7], strides = [1, 1, 1]} : vector<1x2x7xf32> to vector<1x1x7xf32>
    %cst = arith.constant -1.000000e+00 : f32
    %3 = vector.broadcast %cst : f32 to vector<1x1x7xf32>
    %4 = arith.cmpf one, %2, %3 : vector<1x1x7xf32>
    %cst_2 = arith.constant 2.000000e+00 : f32
    %5 = vector.broadcast %cst_2 : f32 to vector<1x1x7xf32>
    %6 = arith.cmpf one, %2, %5 : vector<1x1x7xf32>
    %7 = arith.andi %4, %6 : vector<1x1x7xi1>
    %8 = arith.extui %7 : vector<1x1x7xi1> to vector<1x1x7xi32>
    %9 = arith.sitofp %8 : vector<1x1x7xi32> to vector<1x1x7xf32>
    %cst_3 = arith.constant 9.99999935E-39 : f32
    %10 = vector.broadcast %cst_3 : f32 to vector<1x1x7xf32>
    %11 = arith.maximumf %1, %10 : vector<1x1x7xf32>
    %12 = math.log %11 : vector<1x1x7xf32>
    %cst_4 = arith.constant -1.000000e+02 : f32
    %13 = vector.broadcast %cst_4 : f32 to vector<1x1x7xf32>
    %14 = arith.maximumf %12, %13 : vector<1x1x7xf32>
    %cst_5 = arith.constant 1.000000e+00 : f32
    %15 = vector.broadcast %cst_5 : f32 to vector<1x1x7xf32>
    %16 = arith.subf %15, %1 : vector<1x1x7xf32>
    %cst_6 = arith.constant 9.99999935E-39 : f32
    %17 = vector.broadcast %cst_6 : f32 to vector<1x1x7xf32>
    %18 = arith.maximumf %16, %17 : vector<1x1x7xf32>
    %19 = math.log %18 : vector<1x1x7xf32>
    %cst_7 = arith.constant -1.000000e+02 : f32
    %20 = vector.broadcast %cst_7 : f32 to vector<1x1x7xf32>
    %21 = arith.maximumf %19, %20 : vector<1x1x7xf32>
    %22 = arith.mulf %2, %14 : vector<1x1x7xf32>
    %cst_8 = arith.constant 1.000000e+00 : f32
    %23 = vector.broadcast %cst_8 : f32 to vector<1x1x7xf32>
    %24 = arith.subf %23, %2 : vector<1x1x7xf32>
    %25 = arith.mulf %24, %21 : vector<1x1x7xf32>
    %26 = arith.addf %22, %25 : vector<1x1x7xf32>
    %cst_9 = arith.constant 0.000000e+00 : f32
    %27 = vector.broadcast %cst_9 : f32 to vector<1x1x7xf32>
    %28 = arith.subf %27, %26 : vector<1x1x7xf32>
    %29 = arith.mulf %28, %9 : vector<1x1x7xf32>
    %cst_10 = arith.constant dense<0.000000e+00> : vector<1x1xf32>
    %30 = vector.multi_reduction <add>, %29, %cst_10 [2] : vector<1x1x7xf32> to vector<1x1xf32>
    %31 = vector.shape_cast %30 : vector<1x1xf32> to vector<1x1x1xf32>
    %cst_11 = arith.constant dense<0.000000e+00> : vector<1x1xf32>
    %32 = vector.multi_reduction <add>, %9, %cst_11 [2] : vector<1x1x7xf32> to vector<1x1xf32>
    %33 = vector.shape_cast %32 : vector<1x1xf32> to vector<1x1x1xf32>
    %c0_12 = arith.constant 0 : index
    %c0_13 = arith.constant 0 : index
    %c0_14 = arith.constant 0 : index
    %34 = vector.load %arg5[%c0_12, %c0_13, %c0_14] : memref<1x8x16xbf16, #tpu.memory_space<vmem>>, vector<1x8x16xbf16>
    %35 = arith.extf %34 : vector<1x8x16xbf16> to vector<1x8x16xf32>
    %c0_15 = arith.constant 0 : index
    %c0_16 = arith.constant 0 : index
    %c0_17 = arith.constant 0 : index
    %36 = vector.load %arg6[%c0_15, %c0_16, %c0_17] : memref<1x8x16xbf16, #tpu.memory_space<vmem>>, vector<1x8x16xbf16>
    %37 = arith.extf %36 : vector<1x8x16xbf16> to vector<1x8x16xf32>
    %cst_18 = arith.constant -1.000000e+00 : f32
    %38 = vector.broadcast %cst_18 : f32 to vector<1x8x16xf32>
    %39 = arith.cmpf one, %37, %38 : vector<1x8x16xf32>
    %40 = arith.extui %39 : vector<1x8x16xi1> to vector<1x8x16xi32>
    %41 = arith.sitofp %40 : vector<1x8x16xi32> to vector<1x8x16xf32>
    %42 = arith.subf %35, %37 : vector<1x8x16xf32>
    %43 = arith.mulf %42, %41 : vector<1x8x16xf32>
    %44 = arith.mulf %43, %43 : vector<1x8x16xf32>
    %cst_19 = arith.constant dense<0.000000e+00> : vector<1x8xf32>
    %45 = vector.multi_reduction <add>, %44, %cst_19 [2] : vector<1x8x16xf32> to vector<1x8xf32>
    %46 = vector.shape_cast %45 : vector<1x8xf32> to vector<1x8x1xf32>
    %cst_20 = arith.constant dense<0.000000e+00> : vector<1x1xf32>
    %47 = vector.multi_reduction <add>, %46, %cst_20 [1] : vector<1x8x1xf32> to vector<1x1xf32>
    %48 = vector.shape_cast %47 : vector<1x1xf32> to vector<1x1x1xf32>
    %cst_21 = arith.constant dense<0.000000e+00> : vector<1x8xf32>
    %49 = vector.multi_reduction <add>, %41, %cst_21 [2] : vector<1x8x16xf32> to vector<1x8xf32>
    %50 = vector.shape_cast %49 : vector<1x8xf32> to vector<1x8x1xf32>
    %cst_22 = arith.constant dense<0.000000e+00> : vector<1x1xf32>
    %51 = vector.multi_reduction <add>, %50, %cst_22 [1] : vector<1x8x1xf32> to vector<1x1xf32>
    %52 = vector.shape_cast %51 : vector<1x1xf32> to vector<1x1x1xf32>
    %cst_23 = arith.constant 1.000000e+00 : f32
    %53 = vector.broadcast %cst_23 : f32 to vector<1x1x1xf32>
    %54 = arith.maximumf %52, %53 : vector<1x1x1xf32>
    %55 = arith.divf %48, %54 : vector<1x1x1xf32>
    %c0_24 = arith.constant 0 : index
    %c0_25 = arith.constant 0 : index
    %c0_26 = arith.constant 0 : index
    %56 = vector.load %arg3[%c0_24, %c0_25, %c0_26] : memref<1x8x32xbf16, #tpu.memory_space<vmem>>, vector<1x8x32xbf16>
    %57 = arith.extf %56 : vector<1x8x32xbf16> to vector<1x8x32xf32>
    %c0_27 = arith.constant 0 : index
    %c0_28 = arith.constant 0 : index
    %c0_29 = arith.constant 0 : index
    %58 = vector.load %arg4[%c0_27, %c0_28, %c0_29] : memref<1x8x32xbf16, #tpu.memory_space<vmem>>, vector<1x8x32xbf16>
    %59 = arith.extf %58 : vector<1x8x32xbf16> to vector<1x8x32xf32>
    %c0_30 = arith.constant 0 : index
    %c0_31 = arith.constant 0 : index
    %c0_32 = arith.constant 0 : index
    %60 = vector.load %arg2[%c0_30, %c0_31, %c0_32] : memref<1x8x1xi32, #tpu.memory_space<vmem>>, vector<1x8x1xi32>
    %c1_i32 = arith.constant 1 : i32
    %61 = vector.broadcast %c1_i32 : i32 to vector<1x8x1xi32>
    %62 = arith.cmpi eq, %60, %61 : vector<1x8x1xi32>
    %63 = arith.extui %62 : vector<1x8x1xi1> to vector<1x8x1xi32>
    %64 = arith.sitofp %63 : vector<1x8x1xi32> to vector<1x8x1xf32>
    %cst_33 = arith.constant dense<0.000000e+00> : vector<1x1xf32>
    %65 = vector.multi_reduction <add>, %64, %cst_33 [1] : vector<1x8x1xf32> to vector<1x1xf32>
    %66 = vector.shape_cast %65 : vector<1x1xf32> to vector<1x1x1xf32>
    %67 = arith.mulf %57, %57 : vector<1x8x32xf32>
    %cst_34 = arith.constant dense<0.000000e+00> : vector<1x8xf32>
    %68 = vector.multi_reduction <add>, %67, %cst_34 [2] : vector<1x8x32xf32> to vector<1x8xf32>
    %69 = vector.shape_cast %68 : vector<1x8xf32> to vector<1x8x1xf32>
    %cst_35 = arith.constant 1.000000e-16 : f32
    %70 = vector.broadcast %cst_35 : f32 to vector<1x8x1xf32>
    %71 = arith.maximumf %69, %70 : vector<1x8x1xf32>
    %72 = math.rsqrt %71 : vector<1x8x1xf32>
    %73 = arith.mulf %59, %59 : vector<1x8x32xf32>
    %cst_36 = arith.constant dense<0.000000e+00> : vector<1x8xf32>
    %74 = vector.multi_reduction <add>, %73, %cst_36 [2] : vector<1x8x32xf32> to vector<1x8xf32>
    %75 = vector.shape_cast %74 : vector<1x8xf32> to vector<1x8x1xf32>
    %cst_37 = arith.constant 1.000000e-16 : f32
    %76 = vector.broadcast %cst_37 : f32 to vector<1x8x1xf32>
    %77 = arith.maximumf %75, %76 : vector<1x8x1xf32>
    %78 = math.rsqrt %77 : vector<1x8x1xf32>
    %79 = vector.broadcast %72 : vector<1x8x1xf32> to vector<1x8x32xf32>
    %80 = arith.mulf %57, %79 : vector<1x8x32xf32>
    %81 = vector.broadcast %64 : vector<1x8x1xf32> to vector<1x8x32xf32>
    %82 = arith.mulf %80, %81 : vector<1x8x32xf32>
    %83 = vector.broadcast %78 : vector<1x8x1xf32> to vector<1x8x32xf32>
    %84 = arith.mulf %59, %83 : vector<1x8x32xf32>
    %85 = arith.truncf %82 : vector<1x8x32xf32> to vector<1x8x32xbf16>
    "tpu.trace_start"() <{level = 10 : i32, message = "bsh,bth->bst"}> : () -> ()
    %cst_38 = arith.constant dense<0.000000e+00> : vector<1x8x8xf32>
    %86 = tpu.matmul %85, %85, %cst_38 {dimension_numbers = #tpu.dot_dimension_numbers<[2], [2], [1], [1], [0, 0, 0, 1, 1, 1], [0], [0]>} : vector<1x8x32xbf16>, vector<1x8x32xbf16>, vector<1x8x8xf32> -> vector<1x8x8xf32>
    "tpu.trace_stop"() : () -> ()
    %87 = math.exp %86 : vector<1x8x8xf32>
    %cst_39 = arith.constant dense<0.000000e+00> : vector<1x8xf32>
    %88 = vector.multi_reduction <add>, %87, %cst_39 [2] : vector<1x8x8xf32> to vector<1x8xf32>
    %89 = vector.shape_cast %88 : vector<1x8xf32> to vector<1x8x1xf32>
    %cst_40 = arith.constant 8.000000e+00 : f32
    %90 = vector.broadcast %cst_40 : f32 to vector<1x1x1xf32>
    %91 = arith.subf %90, %66 : vector<1x1x1xf32>
    %92 = vector.broadcast %91 : vector<1x1x1xf32> to vector<1x8x1xf32>
    %93 = arith.subf %89, %92 : vector<1x8x1xf32>
    %cst_41 = arith.constant 2.71828175 : f32
    %94 = vector.broadcast %cst_41 : f32 to vector<1x8x1xf32>
    %95 = arith.subf %93, %94 : vector<1x8x1xf32>
    %96 = arith.mulf %82, %84 : vector<1x8x32xf32>
    %cst_42 = arith.constant dense<0.000000e+00> : vector<1x8xf32>
    %97 = vector.multi_reduction <add>, %96, %cst_42 [2] : vector<1x8x32xf32> to vector<1x8xf32>
    %98 = vector.shape_cast %97 : vector<1x8xf32> to vector<1x8x1xf32>
    %99 = math.exp %98 : vector<1x8x1xf32>
    %cst_43 = arith.constant 0.000000e+00 : f32
    %100 = vector.broadcast %cst_43 : f32 to vector<1x8x1xf32>
    %101 = arith.cmpf ogt, %64, %100 : vector<1x8x1xf32>
    %102 = arith.addf %99, %95 : vector<1x8x1xf32>
    %cst_44 = arith.constant 1.000000e+00 : f32
    %103 = vector.broadcast %cst_44 : f32 to vector<1x8x1xf32>
    %104 = arith.select %101, %102, %103 : vector<1x8x1xi1>, vector<1x8x1xf32>
    %cst_45 = arith.constant 1.000000e-30 : f32
    %105 = vector.broadcast %cst_45 : f32 to vector<1x8x1xf32>
    %106 = arith.maximumf %104, %105 : vector<1x8x1xf32>
    %107 = arith.mulf %64, %99 : vector<1x8x1xf32>
    %108 = tpu.reciprocal %106 {approx = true} : vector<1x8x1xf32> -> vector<1x8x1xf32>
    %109 = arith.mulf %107, %108 : vector<1x8x1xf32>
    %cst_46 = arith.constant dense<0.000000e+00> : vector<1x1xf32>
    %110 = vector.multi_reduction <add>, %109, %cst_46 [1] : vector<1x8x1xf32> to vector<1x1xf32>
    %111 = vector.shape_cast %110 : vector<1x1xf32> to vector<1x1x1xf32>
    %cst_47 = arith.constant 0.000000e+00 : f32
    %112 = vector.broadcast %cst_47 : f32 to vector<1x1x1xf32>
    %113 = arith.cmpf ogt, %66, %112 : vector<1x1x1xf32>
    %cst_48 = arith.constant 9.99999935E-39 : f32
    %114 = vector.broadcast %cst_48 : f32 to vector<1x1x1xf32>
    %115 = arith.maximumf %111, %114 : vector<1x1x1xf32>
    %116 = math.log %115 : vector<1x1x1xf32>
    %cst_49 = arith.constant 0.000000e+00 : f32
    %117 = vector.broadcast %cst_49 : f32 to vector<1x1x1xf32>
    %118 = arith.subf %117, %116 : vector<1x1x1xf32>
    %cst_50 = arith.constant 0.000000e+00 : f32
    %119 = vector.broadcast %cst_50 : f32 to vector<1x1x1xf32>
    %120 = arith.select %113, %118, %119 : vector<1x1x1xi1>, vector<1x1x1xf32>
    %121 = tpu.iota {dimensions = array<i32: 2>} : vector<1x1x128xi32>
    %cst_51 = arith.constant 0.000000e+00 : f32
    %122 = vector.broadcast %cst_51 : f32 to vector<1x1x128xf32>
    %c0_i32 = arith.constant 0 : i32
    %123 = vector.broadcast %c0_i32 : i32 to vector<1x1x128xi32>
    %124 = arith.cmpi eq, %121, %123 : vector<1x1x128xi32>
    %125 = vector.shape_cast %31 : vector<1x1x1xf32> to vector<1x1x1xf32>
    %126 = vector.broadcast %125 : vector<1x1x1xf32> to vector<1x1x128xf32>
    %127 = arith.select %124, %126, %122 : vector<1x1x128xi1>, vector<1x1x128xf32>
    %c1_i32_52 = arith.constant 1 : i32
    %128 = vector.broadcast %c1_i32_52 : i32 to vector<1x1x128xi32>
    %129 = arith.cmpi eq, %121, %128 : vector<1x1x128xi32>
    %130 = vector.shape_cast %33 : vector<1x1x1xf32> to vector<1x1x1xf32>
    %131 = vector.broadcast %130 : vector<1x1x1xf32> to vector<1x1x128xf32>
    %132 = arith.select %129, %131, %127 : vector<1x1x128xi1>, vector<1x1x128xf32>
    %c2_i32 = arith.constant 2 : i32
    %133 = vector.broadcast %c2_i32 : i32 to vector<1x1x128xi32>
    %134 = arith.cmpi eq, %121, %133 : vector<1x1x128xi32>
    %135 = vector.shape_cast %55 : vector<1x1x1xf32> to vector<1x1x1xf32>
    %136 = vector.broadcast %135 : vector<1x1x1xf32> to vector<1x1x128xf32>
    %137 = arith.select %134, %136, %132 : vector<1x1x128xi1>, vector<1x1x128xf32>
    %c3_i32 = arith.constant 3 : i32
    %138 = vector.broadcast %c3_i32 : i32 to vector<1x1x128xi32>
    %139 = arith.cmpi eq, %121, %138 : vector<1x1x128xi32>
    %140 = vector.shape_cast %120 : vector<1x1x1xf32> to vector<1x1x1xf32>
    %141 = vector.broadcast %140 : vector<1x1x1xf32> to vector<1x1x128xf32>
    %142 = arith.select %139, %141, %137 : vector<1x1x128xi1>, vector<1x1x128xf32>
    %c0_53 = arith.constant 0 : index
    %c0_54 = arith.constant 0 : index
    %c0_55 = arith.constant 0 : index
    %143 = vector.load %arg7[%c0_53, %c0_54, %c0_55] : memref<1x1x128xf32, #tpu.memory_space<vmem>>, vector<1x1x128xf32>
    tpu.vector_store %arg7[%c0_53, %c0_54, %c0_55], %142 {strides = array<i32>} : memref<1x1x128xf32, #tpu.memory_space<vmem>>, vector<1x1x128xf32>,
    return
  }
  func.func @transform_0(%arg0: i32) -> (i32, i32, i32) {
    %c0_i32 = arith.constant 0 : i32
    %c0_i32_0 = arith.constant 0 : i32
    %c0_i32_1 = arith.constant 0 : i32
    return %arg0, %c0_i32, %c0_i32_0 : i32, i32, i32
  }
  func.func @transform_1(%arg0: i32) -> (i32, i32, i32) {
    %c0_i32 = arith.constant 0 : i32
    %c0_i32_0 = arith.constant 0 : i32
    %c0_i32_1 = arith.constant 0 : i32
    return %arg0, %c0_i32, %c0_i32_0 : i32, i32, i32
  }
  func.func @transform_2(%arg0: i32) -> (i32, i32, i32) {
    %c0_i32 = arith.constant 0 : i32
    %c0_i32_0 = arith.constant 0 : i32
    %c0_i32_1 = arith.constant 0 : i32
    return %arg0, %c0_i32, %c0_i32_0 : i32, i32, i32
  }
  func.func @transform_3(%arg0: i32) -> (i32, i32, i32) {
    %c0_i32 = arith.constant 0 : i32
    %c0_i32_0 = arith.constant 0 : i32
    %c0_i32_1 = arith.constant 0 : i32
    return %arg0, %c0_i32, %c0_i32_0 : i32, i32, i32
  }
  func.func @transform_4(%arg0: i32) -> (i32, i32, i32) {
    %c0_i32 = arith.constant 0 : i32
    %c0_i32_0 = arith.constant 0 : i32
    %c0_i32_1 = arith.constant 0 : i32
    return %arg0, %c0_i32, %c0_i32_0 : i32, i32, i32
  }
  func.func @transform_5(%arg0: i32) -> (i32, i32, i32) {
    %c0_i32 = arith.constant 0 : i32
    %c0_i32_0 = arith.constant 0 : i32
    %c0_i32_1 = arith.constant 0 : i32
    return %arg0, %c0_i32, %c0_i32_0 : i32, i32, i32
  }
  func.func @transform_6(%arg0: i32) -> (i32, i32, i32) {
    %c0_i32 = arith.constant 0 : i32
    %c0_i32_0 = arith.constant 0 : i32
    %c0_i32_1 = arith.constant 0 : i32
    return %arg0, %c0_i32, %c0_i32_0 : i32, i32, i32
  }
}

</mosaic_0001>

<llo_original>
// kernel: tpu_custom_call.1
$region0: #{tpu_custom_call.1}
  #allocation0 [shape = 'u32[]', space=smem, size = 0x4, offset = 0x4, fixed_abs, tag = 'smem constant byte address 0x4 - core index']
  #allocation1 [shape = 'u32[72,128]{1,0:T(1,128)}', space=vmem, size = 0x9000, scoped, tag = 'internal scratch']
  %s0 = inlined_call_operand.hbm [shape: f32[2,2,7], index: 0, kind: input, shape index: {}]
  %s1 = inlined_call_operand.vmem [shape: s32[2,8,1], index: 1, kind: input, shape index: {}]
  %s2 = inlined_call_operand.vmem [shape: bf16[2,8,32], index: 2, kind: input, shape index: {}]
  %s3 = inlined_call_operand.vmem [shape: bf16[2,8,32], index: 3, kind: input, shape index: {}]
  %s4 = inlined_call_operand.hbm [shape: bf16[2,8,16], index: 4, kind: input, shape index: {}]
  %s5 = inlined_call_operand.hbm [shape: bf16[2,8,16], index: 5, kind: input, shape index: {}]
  %s6 = inlined_call_operand.hbm [shape: f32[2,1,128], index: 6, kind: output, shape index: {}]
  %s7 = sld [smem:[#allocation0]]
  $region69: #{tpu_custom_call.1} parent=0
    _
  %s9 = ssub.s32 1, %s7
  %s10 = scalar_select 0, %s9, %s7
  $region1: #{tpu_custom_call.1} parent=0
    #allocation2 [shape = 'u8[2048]{0}', space=vmem, size = 0x800, scoped, tag = 'input window, operand 0']
    #allocation3 [shape = 's32[2]{0}', space=sflag, size = 0x8, scoped, tag = 'scoped memory for tpu_custom_call.1']
    #allocation4 [shape = 's32[2]{0}', space=sflag, size = 0x8, scoped, tag = 'scoped memory for tpu_custom_call.1']
    #allocation5 [shape = 'u8[4096]{0}', space=vmem, size = 0x1000, scoped, tag = 'input window, operand 4']
    #allocation6 [shape = 's32[2]{0}', space=sflag, size = 0x8, scoped, tag = 'scoped memory for tpu_custom_call.1']
    #allocation7 [shape = 'u8[4096]{0}', space=vmem, size = 0x1000, scoped, tag = 'input window, operand 5']
    #allocation8 [shape = 'u8[1024]{0}', space=vmem, size = 0x400, scoped, tag = 'output window, operand 0']
    %11 = vsyncpa [#allocation3], 0
    %s12 = scalar_lea.sflag [#allocation3], 1
    %13 = vsyncpa %s12, 0
    %14 = vsyncpa [#allocation6], 0
    %s15 = scalar_lea.sflag [#allocation6], 1
    %16 = vsyncpa %s15, 0
    %17 = vsyncpa [#allocation4], 0
    %s18 = scalar_lea.sflag [#allocation4], 1
    %19 = vsyncpa %s18, 0
    loop: start=0, step=1, limit=4
    $region2: #{tpu_custom_call.1} parent=1 // loop_pre_header
      _
    $region3: #{tpu_custom_call.1} parent=1 // loop_header
      %s21 = sphi 0, %s25
      %p22 = scmp.ge.s32.totalorder %s21, 4
      %s31 = sphi 0, %s33
      %s34 = sphi 0, %s31
      %s35 = sphi 0, %s34
      %s51 = sphi 0, %s35
      %s57 = sphi 0, %s59
      %s60 = sphi 0, %s57
      %s61 = sphi 0, %s60
      %s77 = sphi 0, %s61
      %s83 = sphi 0, %s85
      %s86 = sphi 0, %s83
      %s87 = sphi 0, %s86
      %s103 = sphi 0, %s87
      %s109 = sphi 0, %s111
      %s112 = sphi 0, %s109
      %s113 = sphi 0, %s112
      %s129 = sphi 0, %s113
      %s135 = sphi 0, %s137
      %s138 = sphi 0, %s135
      %s139 = sphi 0, %s138
      %s155 = sphi 0, %s139
      %s161 = sphi 0, %s163
      %s164 = sphi 0, %s161
      %s165 = sphi 0, %s164
      %s181 = sphi 0, %s165
      %s187 = sphi 0, %s189
      %s190 = sphi 0, %s187
      %s191 = sphi 0, %s190
      %s207 = sphi 0, %s191
    $region4: #{tpu_custom_call.1} parent=1 // loop_header_branch
      %24 = sbr.rel (%p22) target = $region8
    $region5: #{tpu_custom_call.1} parent=1 // loop_body
      %s26 = ssub.s32 %s21, 1
      %s27 = ssub.s32 %s21, 2
      %s28 = sadd.s32 %s21, 1
      %s29 = ssub.s32 %s21, %s28
      %p30 = scmp.eq.s32.totalorder %s29, 0
      %s32 = sadd.s32 %s31, 1
      %s33 = scalar_select %p30, %s31, %s32
      %p36 = pneg %p30
      %p37 = scmp.eq.s32.totalorder %s21, 1
      %p38 = por %p36, %p37
      %p39 = scmp.ne.s32.totalorder %s31, %s34
      %p40 = scmp.eq.s32.totalorder %s21, 0
      %p41 = por %p39, %p40
      %p42 = scmp.ne.s32.totalorder %s31, %s34
      %p43 = scmp.eq.s32.totalorder %s26, 1
      %p44 = por %p42, %p43
      %p45 = scmp.ne.s32.totalorder %s34, %s35
      %p46 = scmp.eq.s32.totalorder %s26, 0
      %p47 = por %p45, %p46
      %p48 = scmp.ne.s32.totalorder %s34, %s35
      %p49 = scmp.eq.s32.totalorder %s27, 1
      %p50 = por %p48, %p49
      %p52 = scmp.ne.s32.totalorder %s35, %s51
      %p53 = scmp.eq.s32.totalorder %s27, 0
      %p54 = por %p52, %p53
      %s55 = ssub.s32 %s21, %s28
      %p56 = scmp.eq.s32.totalorder %s55, 0
      %s58 = sadd.s32 %s57, 1
      %s59 = scalar_select %p56, %s57, %s58
      %p62 = pneg %p56
      %p63 = scmp.eq.s32.totalorder %s21, 1
      %p64 = por %p62, %p63
      %p65 = scmp.ne.s32.totalorder %s57, %s60
      %p66 = scmp.eq.s32.totalorder %s21, 0
      %p67 = por %p65, %p66
      %p68 = scmp.ne.s32.totalorder %s57, %s60
      %p69 = scmp.eq.s32.totalorder %s26, 1
      %p70 = por %p68, %p69
      %p71 = scmp.ne.s32.totalorder %s60, %s61
      %p72 = scmp.eq.s32.totalorder %s26, 0
      %p73 = por %p71, %p72
      %p74 = scmp.ne.s32.totalorder %s60, %s61
      %p75 = scmp.eq.s32.totalorder %s27, 1
      %p76 = por %p74, %p75
      %p78 = scmp.ne.s32.totalorder %s61, %s77
      %p79 = scmp.eq.s32.totalorder %s27, 0
      %p80 = por %p78, %p79
      %s81 = ssub.s32 %s21, %s28
      %p82 = scmp.eq.s32.totalorder %s81, 0
      %s84 = sadd.s32 %s83, 1
      %s85 = scalar_select %p82, %s83, %s84
      %p88 = pneg %p82
      %p89 = scmp.eq.s32.totalorder %s21, 1
      %p90 = por %p88, %p89
      %p91 = scmp.ne.s32.totalorder %s83, %s86
      %p92 = scmp.eq.s32.totalorder %s21, 0
      %p93 = por %p91, %p92
      %p94 = scmp.ne.s32.totalorder %s83, %s86
      %p95 = scmp.eq.s32.totalorder %s26, 1
      %p96 = por %p94, %p95
      %p97 = scmp.ne.s32.totalorder %s86, %s87
      %p98 = scmp.eq.s32.totalorder %s26, 0
      %p99 = por %p97, %p98
      %p100 = scmp.ne.s32.totalorder %s86, %s87
      %p101 = scmp.eq.s32.totalorder %s27, 1
      %p102 = por %p100, %p101
      %p104 = scmp.ne.s32.totalorder %s87, %s103
      %p105 = scmp.eq.s32.totalorder %s27, 0
      %p106 = por %p104, %p105
      %s107 = ssub.s32 %s21, %s28
      %p108 = scmp.eq.s32.totalorder %s107, 0
      %s110 = sadd.s32 %s109, 1
      %s111 = scalar_select %p108, %s109, %s110
      %p114 = pneg %p108
      %p115 = scmp.eq.s32.totalorder %s21, 1
      %p116 = por %p114, %p115
      %p117 = scmp.ne.s32.totalorder %s109, %s112
      %p118 = scmp.eq.s32.totalorder %s21, 0
      %p119 = por %p117, %p118
      %p120 = scmp.ne.s32.totalorder %s109, %s112
      %p121 = scmp.eq.s32.totalorder %s26, 1
      %p122 = por %p120, %p121
      %p123 = scmp.ne.s32.totalorder %s112, %s113
      %p124 = scmp.eq.s32.totalorder %s26, 0
      %p125 = por %p123, %p124
      %p126 = scmp.ne.s32.totalorder %s112, %s113
      %p127 = scmp.eq.s32.totalorder %s27, 1
      %p128 = por %p126, %p127
      %p130 = scmp.ne.s32.totalorder %s113, %s129
      %p131 = scmp.eq.s32.totalorder %s27, 0
      %p132 = por %p130, %p131
      %s133 = ssub.s32 %s21, %s28
      %p134 = scmp.eq.s32.totalorder %s133, 0
      %s136 = sadd.s32 %s135, 1
      %s137 = scalar_select %p134, %s135, %s136
      %p140 = pneg %p134
      %p141 = scmp.eq.s32.totalorder %s21, 1
      %p142 = por %p140, %p141
      %p143 = scmp.ne.s32.totalorder %s135, %s138
      %p144 = scmp.eq.s32.totalorder %s21, 0
      %p145 = por %p143, %p144
      %p146 = scmp.ne.s32.totalorder %s135, %s138
      %p147 = scmp.eq.s32.totalorder %s26, 1
      %p148 = por %p146, %p147
      %p149 = scmp.ne.s32.totalorder %s138, %s139
      %p150 = scmp.eq.s32.totalorder %s26, 0
      %p151 = por %p149, %p150
      %p152 = scmp.ne.s32.totalorder %s138, %s139
      %p153 = scmp.eq.s32.totalorder %s27, 1
      %p154 = por %p152, %p153
      %p156 = scmp.ne.s32.totalorder %s139, %s155
      %p157 = scmp.eq.s32.totalorder %s27, 0
      %p158 = por %p156, %p157
      %s159 = ssub.s32 %s21, %s28
      %p160 = scmp.eq.s32.totalorder %s159, 0
      %s162 = sadd.s32 %s161, 1
      %s163 = scalar_select %p160, %s161, %s162
      %p166 = pneg %p160
      %p167 = scmp.eq.s32.totalorder %s21, 1
      %p168 = por %p166, %p167
      %p169 = scmp.ne.s32.totalorder %s161, %s164
      %p170 = scmp.eq.s32.totalorder %s21, 0
      %p171 = por %p169, %p170
      %p172 = scmp.ne.s32.totalorder %s161, %s164
      %p173 = scmp.eq.s32.totalorder %s26, 1
      %p174 = por %p172, %p173
      %p175 = scmp.ne.s32.totalorder %s164, %s165
      %p176 = scmp.eq.s32.totalorder %s26, 0
      %p177 = por %p175, %p176
      %p178 = scmp.ne.s32.totalorder %s164, %s165
      %p179 = scmp.eq.s32.totalorder %s27, 1
      %p180 = por %p178, %p179
      %p182 = scmp.ne.s32.totalorder %s165, %s181
      %p183 = scmp.eq.s32.totalorder %s27, 0
      %p184 = por %p182, %p183
      %s185 = ssub.s32 %s21, %s28
      %p186 = scmp.eq.s32.totalorder %s185, 0
      %s188 = sadd.s32 %s187, 1
      %s189 = scalar_select %p186, %s187, %s188
      %p192 = pneg %p186
      %p193 = scmp.eq.s32.totalorder %s21, 1
      %p194 = por %p192, %p193
      %p195 = scmp.ne.s32.totalorder %s187, %s190
      %p196 = scmp.eq.s32.totalorder %s21, 0
      %p197 = por %p195, %p196
      %p198 = scmp.ne.s32.totalorder %s187, %s190
      %p199 = scmp.eq.s32.totalorder %s26, 1
      %p200 = por %p198, %p199
      %p201 = scmp.ne.s32.totalorder %s190, %s191
      %p202 = scmp.eq.s32.totalorder %s26, 0
      %p203 = por %p201, %p202
      %p204 = scmp.ne.s32.totalorder %s190, %s191
      %p205 = scmp.eq.s32.totalorder %s27, 1
      %p206 = por %p204, %p205
      %p208 = scmp.ne.s32.totalorder %s191, %s207
      %p209 = scmp.eq.s32.totalorder %s27, 0
      %p210 = por %p208, %p209
      %p211 = scmp.le.s32.totalorder 1, %s21
      %p212 = scmp.lt.s32.totalorder %s21, 3
      %p213 = pnand %p211, %p212
      %p214 = pneg %p213
      // Predicated region
      $region9: #{tpu_custom_call.1} parent=5 // pred_check
        _
      $region10: #{tpu_custom_call.1} parent=5 // pred_check_branch
        %216 = sbr.rel (%p213) target = $region12
      $region11: #{tpu_custom_call.1} parent=5 // pred_region
        %s217 = ssub.s32 %s21, 1
      $region12: #{tpu_custom_call.1} parent=5 // pred_fallthru
        _
      %p218 = scmp.lt.s32.totalorder %s21, 2
      // Predicated region
      $region13: #{tpu_custom_call.1} parent=5 // pred_check
        %p219 = pneg %p218
      $region14: #{tpu_custom_call.1} parent=5 // pred_check_branch
        %221 = sbr.rel (%p219) target = $region16
      $region15: #{tpu_custom_call.1} parent=5 // pred_region
        // Predicated region
        $region17: #{tpu_custom_call.1} parent=15 // pred_check
          %p222 = pneg %p41
        $region18: #{tpu_custom_call.1} parent=15 // pred_check_branch
          %224 = sbr.rel (%p222) target = $region20
        $region19: #{tpu_custom_call.1} parent=15 // pred_region
          %s225 = sand.u32 %s31, 1
          %s226 = scalar_lea.sflag [#allocation3], %s225
          %s227 = sand.u32 %s31, 1
          %s228 = smul.addr %s227, 2
          %s229 = scalar_lea.vmem [#allocation2], %s228
          %231 = vsyncadd %s226, 0
          %s232 = smul.addr %s21, 2
          %s233 = scalar_lea.hbm %s0, %s232
          %s235 = sshll.u32 %s233, 4
          %s236 = int_to_ptr.hbm [resolvable:$true] %s235
          %s237 = sshll.u32 %s229, 4
          %s238 = int_to_ptr.vmem [resolvable:$true] %s237
          %240 = dma.hbm_to_vmem [thread:$0]  %s236, 32, %s238, %s226
        $region20: #{tpu_custom_call.1} parent=15 // pred_fallthru
          _
        // Predicated region
        $region21: #{tpu_custom_call.1} parent=15 // pred_check
          %p241 = pneg %p67
        $region22: #{tpu_custom_call.1} parent=15 // pred_check_branch
          %243 = sbr.rel (%p241) target = $region24
        $region23: #{tpu_custom_call.1} parent=15 // pred_region
          %p244 = scmp.lt.s32.totalorder %s21, 1
          %s245 = scalar_select %p244, %s21, 1
          %s246 = smul.addr %s245, 8
          %s247 = scalar_lea.vmem %s1, %s246
        $region24: #{tpu_custom_call.1} parent=15 // pred_fallthru
          _
        // Predicated region
        $region25: #{tpu_custom_call.1} parent=15 // pred_check
          %p248 = pneg %p93
        $region26: #{tpu_custom_call.1} parent=15 // pred_check_branch
          %250 = sbr.rel (%p248) target = $region28
        $region27: #{tpu_custom_call.1} parent=15 // pred_region
          %p251 = scmp.lt.s32.totalorder %s21, 1
          %s252 = scalar_select %p251, %s21, 1
          %s253 = smul.addr %s252, 4
          %s254 = scalar_lea.vmem %s2, %s253
        $region28: #{tpu_custom_call.1} parent=15 // pred_fallthru
          _
        // Predicated region
        $region29: #{tpu_custom_call.1} parent=15 // pred_check
          %p255 = pneg %p119
        $region30: #{tpu_custom_call.1} parent=15 // pred_check_branch
          %257 = sbr.rel (%p255) target = $region32
        $region31: #{tpu_custom_call.1} parent=15 // pred_region
          %p258 = scmp.lt.s32.totalorder %s21, 1
          %s259 = scalar_select %p258, %s21, 1
          %s260 = smul.addr %s259, 4
          %s261 = scalar_lea.vmem %s3, %s260
        $region32: #{tpu_custom_call.1} parent=15 // pred_fallthru
          _
        // Predicated region
        $region33: #{tpu_custom_call.1} parent=15 // pred_check
          %p262 = pneg %p145
        $region34: #{tpu_custom_call.1} parent=15 // pred_check_branch
          %264 = sbr.rel (%p262) target = $region36
        $region35: #{tpu_custom_call.1} parent=15 // pred_region
          %s265 = sand.u32 %s21, 1
          %s266 = scalar_lea.sflag [#allocation6], %s265
          %s267 = sand.u32 %s135, 1
          %s268 = smul.addr %s267, 4
          %s269 = scalar_lea.vmem [#allocation5], %s268
          %271 = vsyncadd %s266, 0
          %s272 = smul.addr %s21, 4
          %s273 = scalar_lea.hbm %s4, %s272
          %s275 = sshll.u32 %s273, 4
          %s276 = int_to_ptr.hbm [resolvable:$true] %s275
          %s277 = sshll.u32 %s269, 4
          %s278 = int_to_ptr.vmem [resolvable:$true] %s277
          %280 = dma.hbm_to_vmem [thread:$0]  %s276, 64, %s278, %s266
        $region36: #{tpu_custom_call.1} parent=15 // pred_fallthru
          _
        // Predicated region
        $region37: #{tpu_custom_call.1} parent=15 // pred_check
          %p281 = pneg %p171
        $region38: #{tpu_custom_call.1} parent=15 // pred_check_branch
          %283 = sbr.rel (%p281) target = $region40
        $region39: #{tpu_custom_call.1} parent=15 // pred_region
          %s284 = sand.u32 %s21, 1
          %s285 = scalar_lea.sflag [#allocation6], %s284
          %s286 = sand.u32 %s161, 1
          %s287 = smul.addr %s286, 4
          %s288 = scalar_lea.vmem [#allocation7], %s287
          %290 = vsyncadd %s285, 0
          %s291 = smul.addr %s21, 4
          %s292 = scalar_lea.hbm %s5, %s291
          %s294 = sshll.u32 %s292, 4
          %s295 = int_to_ptr.hbm [resolvable:$true] %s294
          %s296 = sshll.u32 %s288, 4
          %s297 = int_to_ptr.vmem [resolvable:$true] %s296
          %299 = dma.hbm_to_vmem [thread:$0]  %s295, 64, %s297, %s285
        $region40: #{tpu_custom_call.1} parent=15 // pred_fallthru
          _
      $region16: #{tpu_custom_call.1} parent=5 // pred_fallthru
        _
      %p300 = scmp.le.s32.totalorder 1, %s21
      %p301 = scmp.lt.s32.totalorder %s21, 3
      %p302 = pnand %p300, %p301
      %p303 = pneg %p302
      // Predicated region
      $region41: #{tpu_custom_call.1} parent=5 // pred_check
        _
      $region42: #{tpu_custom_call.1} parent=5 // pred_check_branch
        %305 = sbr.rel (%p302) target = $region44
      $region43: #{tpu_custom_call.1} parent=5 // pred_region
        %s306 = ssub.s32 %s21, 1
        %s307 = sand.u32 %s34, 1
        %s308 = scalar_lea.sflag [#allocation3], %s307
        %s309 = sand.u32 %s34, 1
        %s310 = smul.addr %s309, 2
        %s311 = scalar_lea.vmem [#allocation2], %s310
        // Predicated region
        $region45: #{tpu_custom_call.1} parent=43 // pred_check
          %p312 = pneg %p47
        $region46: #{tpu_custom_call.1} parent=43 // pred_check_branch
          %314 = sbr.rel (%p312) target = $region48
        $region47: #{tpu_custom_call.1} parent=43 // pred_region
          %316 = dma.done %s308, 32
        $region48: #{tpu_custom_call.1} parent=43 // pred_fallthru
          _
        %s317 = sand.u32 %s26, 1
        %s318 = scalar_lea.sflag [#allocation6], %s317
        %s319 = sand.u32 %s138, 1
        %s320 = smul.addr %s319, 4
        %s321 = scalar_lea.vmem [#allocation5], %s320
        // Predicated region
        $region49: #{tpu_custom_call.1} parent=43 // pred_check
          %p322 = pneg %p151
        $region50: #{tpu_custom_call.1} parent=43 // pred_check_branch
          %324 = sbr.rel (%p322) target = $region52
        $region51: #{tpu_custom_call.1} parent=43 // pred_region
          %326 = dma.done %s318, 64
        $region52: #{tpu_custom_call.1} parent=43 // pred_fallthru
          _
        %s327 = sand.u32 %s26, 1
        %s328 = scalar_lea.sflag [#allocation6], %s327
        %s329 = sand.u32 %s164, 1
        %s330 = smul.addr %s329, 4
        %s331 = scalar_lea.vmem [#allocation7], %s330
        // Predicated region
        $region53: #{tpu_custom_call.1} parent=43 // pred_check
          %p332 = pneg %p177
        $region54: #{tpu_custom_call.1} parent=43 // pred_check_branch
          %334 = sbr.rel (%p332) target = $region56
        $region55: #{tpu_custom_call.1} parent=43 // pred_region
          %336 = dma.done %s328, 64
        $region56: #{tpu_custom_call.1} parent=43 // pred_fallthru
          _
        %s337 = sand.u32 %s34, 1
        %s338 = scalar_lea.sflag [#allocation3], %s337
        %s339 = sand.u32 %s34, 1
        %s340 = smul.addr %s339, 2
        %s341 = scalar_lea.vmem [#allocation2], %s340
        %p342 = pneg %p47
        %p343 = pneg %p44
        %p344 = scmp.lt.s32.totalorder %s26, 1
        %s345 = scalar_select %p344, %s26, 1
        %s346 = smul.addr %s345, 8
        %s347 = scalar_lea.vmem %s1, %s346
        %p348 = pneg %p73
        %p349 = pneg %p70
        %p350 = scmp.lt.s32.totalorder %s26, 1
        %s351 = scalar_select %p350, %s26, 1
        %s352 = smul.addr %s351, 4
        %s353 = scalar_lea.vmem %s2, %s352
        %p354 = pneg %p99
        %p355 = pneg %p96
        %p356 = scmp.lt.s32.totalorder %s26, 1
        %s357 = scalar_select %p356, %s26, 1
        %s358 = smul.addr %s357, 4
        %s359 = scalar_lea.vmem %s3, %s358
        %p360 = pneg %p125
        %p361 = pneg %p122
        %s362 = sand.u32 %s26, 1
        %s363 = scalar_lea.sflag [#allocation6], %s362
        %s364 = sand.u32 %s138, 1
        %s365 = smul.addr %s364, 4
        %s366 = scalar_lea.vmem [#allocation5], %s365
        %p367 = pneg %p151
        %p368 = pneg %p148
        %s369 = sand.u32 %s26, 1
        %s370 = scalar_lea.sflag [#allocation6], %s369
        %s371 = sand.u32 %s164, 1
        %s372 = smul.addr %s371, 4
        %s373 = scalar_lea.vmem [#allocation7], %s372
        %p374 = pneg %p177
        %p375 = pneg %p174
        %p376 = pneg %p203
        %p377 = pneg %p200
        %s378 = sand.u32 %s190, 1
        %s379 = scalar_lea.sflag [#allocation4], %s378
        %s380 = sand.u32 %s190, 1
        %s381 = scalar_lea.vmem [#allocation8], %s380
        %p382 = scmp.lt.s32.totalorder %s26, 1
        %s383 = scalar_select %p382, %s26, 1
        %s384 = smul.addr %s383, 8
        %s385 = scalar_lea.vmem %s1, %s384
        %p386 = scmp.lt.s32.totalorder %s26, 1
        %s387 = scalar_select %p386, %s26, 1
        %s388 = smul.addr %s387, 4
        %s389 = scalar_lea.vmem %s2, %s388
        %p390 = scmp.lt.s32.totalorder %s26, 1
        %s391 = scalar_select %p390, %s26, 1
        %s392 = smul.addr %s391, 4
        %s393 = scalar_lea.vmem %s3, %s392
        %v395 = vld [vmem:[%s311] sm:$0x3]
        %vm396 = vcmp.ne.f32.partialorder %v395, -1.0
        %vm397 = vcmp.ne.f32.partialorder %v395, 2.0
        %vm398 = vmand %vm396, %vm397
        %v399 = vsel %vm398, 1, 0
        %v400 = vcvt.s32.f32 %v399
        %v401 = vmax.f32 %v395, 1e-38
        %v402 = vlog2.pop %v401
        %v403 = vmul.f32 %v402, 0.6931472
        %v404 = vmax.f32 %v403, -100.0
        %v405 = vsub.f32 1.0, %v395
        %v406 = vmax.f32 %v405, 1e-38
        %v407 = vlog2.pop %v406
        %v408 = vmul.f32 %v407, 0.6931472
        %v409 = vmax.f32 %v408, -100.0
        %v411 = vrot.slane %v404, 7
        %v413 = vmul.f32 %v395, %v411
        %v415 = vrot.slane %v409, 7
        %v417 = vmul.f32 %v405, %v415
        %v418 = vadd.f32 %v413, %v417
        %v419 = vsub.f32 0.0, %v418
        %v420 = vmul.f32 %v419, %v400
        %vm421 = vcmask 50177
        %v422 = vsel %vm421, %v420, 0.0
        %423 = vadd.xlane.f32.xlu0 %v422
        %v424 = vpop.xlane.xlu0 %423
        %v425 = vsel %vm421, %v400, 0.0
        %426 = vadd.xlane.f32.xlu0 %v425
        %v427 = vpop.xlane.xlu0 %426
        %v428 = vld [vmem:[%s321] sm:$0xf]
        %v429 = vunpack.c.l.bf16 %v428
        %v430 = vld [vmem:[%s331] sm:$0xf]
        %v431 = vunpack.c.l.bf16 %v430
        %vm432 = vcmp.ne.f32.partialorder %v431, -1.0
        %v433 = vsel %vm432, 1, 0
        %v434 = vcvt.s32.f32 %v433
        %v435 = vsub.f32 %v429, %v431
        %v436 = vmul.f32 %v435, %v434
        %v437 = vmul.f32 %v436, %v436
        %vm438 = vcmask 130048
        %v439 = vsel %vm438, %v437, 0.0
        %440 = vadd.xlane.f32.xlu0 %v439
        %v441 = vpop.xlane.xlu0 %440
        %v442 = vrot.slane %v441, 4
        %v443 = vadd.f32 %v441, %v442
        %v444 = vrot.slane %v443, 2
        %v445 = vadd.f32 %v443, %v444
        %v446 = vrot.slane %v445, 1
        %v447 = vadd.f32 %v445, %v446
        %v448 = vsel %vm438, %v434, 0.0
        %449 = vadd.xlane.f32.xlu0 %v448
        %v450 = vpop.xlane.xlu0 %449
        %v451 = vrot.slane %v450, 4
        %v452 = vadd.f32 %v450, %v451
        %v453 = vrot.slane %v452, 2
        %v454 = vadd.f32 %v452, %v453
        %v455 = vrot.slane %v454, 1
        %v456 = vadd.f32 %v454, %v455
        %v457 = vmax.f32 %v456, 1.0
        %v458 = vrcp.pop %v457
        %v459 = vmul.f32 %v457, %v458
        %v460 = vsub.f32 1.0, %v459
        %v461 = vmul.f32 %v458, %v460
        %v462 = vadd.f32 %v458, %v461
        %vm463 = vweird.f32 %v457
        %vm464 = vweird.f32 %v458
        %vm465 = vmor %vm463, %vm464
        %v466 = vsel %vm465, %v458, %v462
        %v467 = vand.u32 2147483647, %v457
        %vm468 = vcmp.eq.f32.partialorder %v467, 8.507059e+37
        %v469 = vand.u32 %v457, 2147483648
        %v470 = vor.u32 1.1754944e-38, %v469
        %v471 = vsel %vm468, %v470, %v466
        %v472 = vmul.f32 %v447, %v471
        %v473 = vld [vmem:[%s389] sm:$0xf]
        %v474 = vunpack.c.l.bf16 %v473
        %v475 = vld [vmem:[%s393] sm:$0xf]
        %v476 = vunpack.c.l.bf16 %v475
        %v477 = vld [vmem:[%s385] sm:$0xff]
        %vm478 = vcmp.eq.s32.totalorder %v477, 1
        %v479 = vsel %vm478, 1, 0
        %v480 = vcvt.s32.f32 %v479
        %vm481 = vcmask 7168
        %v482 = vsel %vm481, %v480, 0.0
        %v483 = vrot.slane %v482, 4
        %v484 = vadd.f32 %v482, %v483
        %v485 = vrot.slane %v484, 2
        %v486 = vadd.f32 %v484, %v485
        %v487 = vrot.slane %v486, 1
        %v488 = vadd.f32 %v486, %v487
        %v489 = vmul.f32 %v474, %v474
        %vm490 = vcmask 261120
        %v491 = vsel %vm490, %v489, 0.0
        %492 = vadd.xlane.f32.xlu0 %v491
        %v493 = vpop.xlane.xlu0 %492
        %v494 = vmax.f32 %v493, 1e-16
        %v495 = vrsqrt.pop %v494
        %v496 = vmul.f32 %v495, %v494
        %v497 = vmul.f32 %v496, %v495
        %v498 = vmul.f32 0.5, %v497
        %v499 = vsub.f32 1.5, %v498
        %v500 = vmul.f32 %v495, %v499
        %vm501 = vweird.f32 %v494
        %vm502 = vweird.f32 %v495
        %vm503 = vmor %vm501, %vm502
        %v504 = vsel %vm503, %v495, %v500
        %v505 = vmul.f32 %v476, %v476
        %v506 = vsel %vm490, %v505, 0.0
        %507 = vadd.xlane.f32.xlu0 %v506
        %v508 = vpop.xlane.xlu0 %507
        %v509 = vmax.f32 %v508, 1e-16
        %v510 = vrsqrt.pop %v509
        %v511 = vmul.f32 %v510, %v509
        %v512 = vmul.f32 %v511, %v510
        %v513 = vmul.f32 0.5, %v512
        %v514 = vsub.f32 1.5, %v513
        %v515 = vmul.f32 %v510, %v514
        %vm516 = vweird.f32 %v509
        %vm517 = vweird.f32 %v510
        %vm518 = vmor %vm516, %vm517
        %v519 = vsel %vm518, %v510, %v515
        %v520 = vmul.f32 %v474, %v504
        %522 = vset.pattern.permute.xlu0 0
        %523 = vperm.xlu0 %522, %v480
        %v524 = vpop.permute.xlu0 %523
        %v526 = vmul.f32 %v520, %v524
        %v527 = vmul.f32 %v476, %v519
        %v528 = vpack.c.bf16 %v526, %v526
        %v530 = vsel %vm490, %v528, 0
        %532 = vmatpush.bf16.xpose.msra.mxu0 0
        %533 = vmatpush.bf16.xpose.msra.mxu0 0
        %534 = vmatpush.bf16.xpose.msra.mxu0 0
        %535 = vmatpush.bf16.xpose.msra.mxu0 0
        %536 = vmatpush.bf16.xpose.msra.mxu0 0
        %537 = vmatpush.bf16.xpose.msra.mxu0 0
        %538 = vmatpush.bf16.xpose.msra.mxu0 0
        %539 = vmatpush.bf16.xpose.msra.mxu0 %v530
        %540 = vmatmul.bf16.gmra.mxu0 %v530
        %v541 = vpop.f32.mrf.mxu0
        %v542 = vadd.f32 0.0, %v541
        %v543 = vpop.f32.mrf.mxu0
        %544 = vdwg.mxu0
        %v545 = vmul.f32 %v542, 1.442695
        %v546 = vpow.pop %v545
        %vm547 = vcmask 64512
        %v548 = vsel %vm547, %v546, 0.0
        %549 = vadd.xlane.f32.xlu0 %v548
        %v550 = vpop.xlane.xlu0 %549
        %v551 = vsub.f32 8.0, %v488
        %v552 = vsub.f32 %v550, %v551
        %v553 = vsub.f32 %v552, 2.7182817
        %v554 = vmul.f32 %v526, %v527
        %v555 = vsel %vm490, %v554, 0.0
        %556 = vadd.xlane.f32.xlu0 %v555
        %v557 = vpop.xlane.xlu0 %556
        %v558 = vmul.f32 %v557, 1.442695
        %v559 = vpow.pop %v558
        %vm560 = vcmp.gt.f32.partialorder %v480, 0.0
        %v561 = vadd.f32 %v559, %v553
        %v562 = vsel %vm560, %v561, 1.0
        %v563 = vmax.f32 %v562, 1e-30
        %v564 = vmul.f32 %v480, %v559
        %v565 = vrcp.pop %v563
        %v566 = vmul.f32 %v564, %v565
        %v567 = vsel %vm481, %v566, 0.0
        %v568 = vrot.slane %v567, 4
        %v569 = vadd.f32 %v567, %v568
        %v570 = vrot.slane %v569, 2
        %v571 = vadd.f32 %v569, %v570
        %v572 = vrot.slane %v571, 1
        %v573 = vadd.f32 %v571, %v572
        %vm574 = vcmp.gt.f32.partialorder %v488, 0.0
        %v575 = vmax.f32 %v573, 1e-38
        %v576 = vlog2.pop %v575
        %v577 = vmul.f32 %v576, 0.6931472
        %v578 = vsub.f32 0.0, %v577
        %v579 = vsel %vm574, %v578, 0.0
        %v580 = vlaneseq
        %v581 = vand.u32 %v580, 127
        %vm582 = vcmp.eq.s32.totalorder %v581, 0
        %v583 = vsel %vm582, %v424, 0.0
        %vm584 = vcmp.eq.s32.totalorder %v581, 1
        %v585 = vsel %vm584, %v427, %v583
        %vm586 = vcmp.eq.s32.totalorder %v581, 2
        %v587 = vsel %vm586, %v472, %v585
        %vm588 = vcmp.eq.s32.totalorder %v581, 3
        %590 = vset.pattern.permute.xlu0 0
        %591 = vperm.xlu0 %590, %v579
        %v592 = vpop.permute.xlu0 %591
        %v594 = vsel %vm588, %v592, %v587
        %595 = vst [vmem:[%s381 - $0x1] sm:$0x2] %v594
        %s596 = sand.u32 %s190, 1
        %s597 = scalar_lea.sflag [#allocation4], %s596
        %s598 = sand.u32 %s190, 1
        %s599 = scalar_lea.vmem [#allocation8], %s598
        // Predicated region
        $region57: #{tpu_custom_call.1} parent=43 // pred_check
          %p600 = pneg %p200
        $region58: #{tpu_custom_call.1} parent=43 // pred_check_branch
          %602 = sbr.rel (%p600) target = $region60
        $region59: #{tpu_custom_call.1} parent=43 // pred_region
          %604 = vsyncadd %s597, 0
          %s605 = scalar_lea.hbm %s6, %s26
          %s607 = sshll.u32 %s599, 4
          %s608 = int_to_ptr.vmem [resolvable:$true] %s607
          %s609 = sshll.u32 %s605, 4
          %s610 = int_to_ptr.hbm [resolvable:$true] %s609
          %612 = dma.vmem_to_hbm [thread:$0]  %s608, 16, %s610, %s597
        $region60: #{tpu_custom_call.1} parent=43 // pred_fallthru
          _
      $region44: #{tpu_custom_call.1} parent=5 // pred_fallthru
        _
      %p613 = scmp.le.s32.totalorder 2, %s21
      // Predicated region
      $region61: #{tpu_custom_call.1} parent=5 // pred_check
        %p614 = pneg %p613
      $region62: #{tpu_custom_call.1} parent=5 // pred_check_branch
        %616 = sbr.rel (%p614) target = $region64
      $region63: #{tpu_custom_call.1} parent=5 // pred_region
        %s617 = ssub.s32 %s21, 2
        // Predicated region
        $region65: #{tpu_custom_call.1} parent=63 // pred_check
          %p618 = pneg %p206
        $region66: #{tpu_custom_call.1} parent=63 // pred_check_branch
          %620 = sbr.rel (%p618) target = $region68
        $region67: #{tpu_custom_call.1} parent=63 // pred_region
          %s621 = sand.u32 %s191, 1
          %s622 = scalar_lea.sflag [#allocation4], %s621
          %s623 = sand.u32 %s191, 1
          %s624 = scalar_lea.vmem [#allocation8], %s623
          %626 = dma.done %s622, 16
        $region68: #{tpu_custom_call.1} parent=63 // pred_fallthru
          _
      $region64: #{tpu_custom_call.1} parent=5 // pred_fallthru
        _
    $region6: #{tpu_custom_call.1} parent=1 // loop_footer
      %s25 = sadd.s32 1, %s21
    $region7: #{tpu_custom_call.1} parent=1 // loop_footer_branch
      %20 = sbr.rel target = $region3
    $region8: #{tpu_custom_call.1} parent=1 // loop_exit
      _
    %627 = vsyncpa [#allocation3], 1
    %s628 = scalar_lea.sflag [#allocation3], 1
    %629 = vsyncpa %s628, 1
    %630 = vsyncpa [#allocation6], 1
    %s631 = scalar_lea.sflag [#allocation6], 1
    %632 = vsyncpa %s631, 1
    %633 = vsyncpa [#allocation4], 1
    %s634 = scalar_lea.sflag [#allocation4], 1
    %635 = vsyncpa %s634, 1

</llo_original>
